<compile_context>
chip_gen: v7x
topology: tpu7x:2x2x1
jax: 0.10.0
libtpu: 0.0.40
codegen_flags: <defaults>
</compile_context>

<pallas_src>
import functools

import jax
import jax.numpy as jnp
from jax import lax
from jax.experimental import pallas as pl
from jax.experimental.pallas import tpu as pltpu


def _round_up(x: int, m: int) -> int:
    return ((x + m - 1) // m) * m


def _ceil_div(a: int, b: int) -> int:
    return -(-a // b)


# ----------------------------------------------------------------------------
# Parameter packing: all layers into one pre-padded (R, C) f32 buffer.
#
# Layer 0 is consumed as separate W rows [0, D) and a bias row (row D); the
# kernel adds the bias row explicitly, so the input never has to be padded to
# 128 lanes in HBM.
# For layers l >= 1 the input activation carries a 1.0 at lane sizes[l] (the
# "ones lane"), so x_aug @ W_aug == x @ W + b.  The 1.0 is produced by the
# *previous* layer: we set blk[bias_row, sizes[l+1]] = 1.0 at pack time (folded
# into the weights -- no per-layer iota/select in the kernel).
# ----------------------------------------------------------------------------
def pack_params(params, input_dim, hidden_dim, a_dim):
    sizes = [int(input_dim)] + [int(h) for h in hidden_dim] + [int(a_dim)]
    n_layers = len(sizes) - 1
    Ap = _round_up(sizes[-1], 128)

    widths = []                                  # padded output lane width per layer
    for l in range(n_layers):
        if l < n_layers - 1:
            widths.append(_round_up(sizes[l + 1] + 1, 128))  # room for ones lane
        else:
            widths.append(Ap)
    # block row counts; layer l>=1 rows must equal the previous layer's width
    rows = [_round_up(sizes[0] + 1, 8)] + [widths[l - 1] for l in range(1, n_layers)]
    C = max(widths)

    blocks = []
    for l in range(n_layers):
        w = jnp.asarray(params[2 * l], jnp.float32)
        b = jnp.asarray(params[2 * l + 1], jnp.float32).reshape(-1)
        din, dout = sizes[l], sizes[l + 1]
        blk = jnp.zeros((rows[l], C), jnp.float32)
        blk = blk.at[:din, :dout].set(w)
        blk = blk.at[din, :dout].set(b)              # bias row
        if l < n_layers - 1:
            blk = blk.at[din, dout].set(1.0)         # ones lane for next layer's bias
        blocks.append(blk)

    packed = jnp.concatenate(blocks, axis=0)
    dims = (sizes[0], sizes[-1], Ap, C, tuple(rows), tuple(widths))
    return packed, dims


# ----------------------------------------------------------------------------
# Fused kernel: MLP -> softplus -> softmax -> entropy -> sample / argmax
# ----------------------------------------------------------------------------
def _make_kernel(dims, deterministic):
    D, A, Ap, C, rows, widths = dims
    n_layers = len(rows)

    def kernel(x_ref, noise_ref, p_ref, out_ref):
        tb = x_ref.shape[0]

        # ---- layer 0: raw (TB, D) input, explicit bias row ----
        w0 = p_ref[0:D, 0:widths[0]]
        b0 = p_ref[D:D + 1, 0:widths[0]]             # bias (+ ones lane if hidden)
        h = jnp.dot(x_ref[...], w0, preferred_element_type=jnp.float32) + b0
        if n_layers > 1:
            h = jnp.maximum(h, 0.0)

        # ---- layers 1..n-1: biases + ones lane folded into packed weights ----
        off = rows[0]
        for l in range(1, n_layers):
            w = p_ref[off:off + rows[l], 0:widths[l]]
            h = jnp.dot(h, w, preferred_element_type=jnp.float32)
            if l < n_layers - 1:
                h = jnp.maximum(h, 0.0)
            off += rows[l]
        raw = h                                       # (TB, Ap); padded lanes are 0

        lane_a = lax.broadcasted_iota(jnp.int32, (tb, Ap), 1)
        valid = lane_a < A

        # softplus (stable, exp/log only); padded lanes -> -inf for the softmax
        sp = jnp.maximum(raw, 0.0) + jnp.log(1.0 + jnp.exp(-jnp.abs(raw)))
        logits = jnp.where(valid, sp, -jnp.inf)

        # stable softmax / log-softmax; probs via (TB,1) reciprocal, not exp(logp)
        m = jnp.max(logits, axis=-1, keepdims=True)
        e = jnp.where(valid, jnp.exp(logits - m), 0.0)
        s = jnp.sum(e, axis=-1, keepdims=True)
        inv_s = 1.0 / s
        probs = e * inv_s
        logp = jnp.where(valid, logits - (m + jnp.log(s)), 0.0)   # 0 in padded lanes
        entropy = -jnp.sum(probs * logp, axis=-1, keepdims=True)

        # ---- fused action selection ----
        neg_big = jnp.float32(-1e30)
        if deterministic:
            scores = jnp.where(valid, probs, neg_big)
        else:
            # exponential race: argmax_i probs_i / E_i  ~  Categorical(probs)
            scores = jnp.where(valid, probs / noise_ref[...], neg_big)

        best = jnp.max(scores, axis=-1, keepdims=True)
        lane_f = lane_a.astype(jnp.float32)
        idx = jnp.min(jnp.where(scores >= best, lane_f, jnp.float32(Ap)),
                      axis=-1, keepdims=True)          # first-index tie-break
        one_hot = jnp.where(lane_f == idx, jnp.float32(1.0), jnp.float32(0.0))
        logprob_sel = jnp.sum(one_hot * logp, axis=-1, keepdims=True)
        prob_sel = jnp.sum(one_hot * probs, axis=-1, keepdims=True)

        # ---- single lane-dense output slab ----
        out_ref[:, 0:Ap] = probs
        out_ref[:, Ap:2 * Ap] = logp
        out_ref[:, 2 * Ap:3 * Ap] = one_hot
        lane_s = lax.broadcasted_iota(jnp.int32, (tb, 128), 1)
        scal = jnp.where(lane_s == 0, entropy,
               jnp.where(lane_s == 1, idx,
               jnp.where(lane_s == 2, logprob_sel,
               jnp.where(lane_s == 3, prob_sel, jnp.float32(0.0)))))
        out_ref[:, 3 * Ap:3 * Ap + 128] = scal

    return kernel


def _run_hc_policy_kernel(x, noise, packed, dims, TB, deterministic):
    D, A, Ap, C, rows, widths = dims
    Bp = x.shape[0]
    R = packed.shape[0]
    C_out = 3 * Ap + 128

    kernel = _make_kernel(dims, deterministic)

    grid_spec = pltpu.PrefetchScalarGridSpec(
        num_scalar_prefetch=0,
        grid=(Bp // TB,),
        in_specs=[
            pl.BlockSpec((TB, D), lambda i: (i, 0)),    # raw input (batch-tiled only)
            pl.BlockSpec((TB, Ap), lambda i: (i, 0)),   # Exp(1) noise, row-indexed
            pl.BlockSpec((R, C), lambda i: (0, 0)),     # resident packed weights
        ],
        out_specs=pl.BlockSpec((TB, C_out), lambda i: (i, 0)),
    )
    return pl.pallas_call(
        kernel,
        out_shape=jax.ShapeDtypeStruct((Bp, C_out), jnp.float32),
        grid_spec=grid_spec,
        compiler_params=pltpu.CompilerParams(
            dimension_semantics=("parallel",)),
    )(x, noise, packed)


# ----------------------------------------------------------------------------
# Wrapper mirroring HC_Policy.forward semantics
# ----------------------------------------------------------------------------
@functools.partial(jax.jit, static_argnames=("dims", "deterministic"))
def hc_policy_forward(state, packed, key, dims, deterministic=False):
    D, A, Ap, C, rows, widths = dims

    # Mirror: if state is 1-D or 3-D, add batch dim and flatten features.
    if state.ndim == 3 or state.ndim == 1:
        state = state[None]
        state = state.reshape(state.shape[0], -1)
    state = state.astype(jnp.float32)
    B = state.shape[0]

    # Tile selection: minimal batch padding, even tile count when tiled.
    TB_CAP = 512
    n_tiles = max(_ceil_div(B, TB_CAP), 1)
    if n_tiles > 1 and n_tiles % 2 == 1:
        n_tiles += 1                      # balance v7x's two TensorCores
    TB = _round_up(_ceil_div(B, n_tiles), 8)
    Bp = TB * n_tiles

    x_pad = state if Bp == B else jnp.zeros((Bp, D), jnp.float32).at[:B].set(state)

    if deterministic:
        noise = jnp.ones((Bp, Ap), jnp.float32)       # unused by the kernel
    else:
        noise = jnp.maximum(jax.random.exponential(key, (Bp, Ap), jnp.float32),
                            jnp.float32(1e-30))

    out = _run_hc_policy_kernel(x_pad, noise, packed, dims, TB, deterministic)

    probs_full = out[:B, 0:A]
    logp_full = out[:B, Ap:Ap + A]
    z = out[:B, 2 * Ap:2 * Ap + A].astype(jnp.int32)   # one-hot from the kernel
    scal = out[:B, 3 * Ap:3 * Ap + 4]
    entropy = scal[:, 0]
    z_argmax = scal[:, 1].astype(jnp.int32)
    logprobs = scal[:, 2]
    probs_sel = scal[:, 3]

    # TODO(synk): torch.distributions.Categorical object has no JAX
    # equivalent; probs / log-probs are returned in `info` instead.
    info = {
        "dist_probs": probs_full,
        "dist_logp": logp_full,
        "probs": probs_sel,
        "logprobs": logprobs,
        "entropy": entropy,
    }
    return z, z_argmax, info


# ----------------------------------------------------------------------------
# Deterministic parameter init (MLP: input_dim -> hidden_dim[...] -> a_dim)
# ----------------------------------------------------------------------------
def init_params(key, input_dim, hidden_dim, a_dim):
    dims_ = [input_dim] + list(hidden_dim) + [a_dim]
    params = []
    keys = jax.random.split(key, 2 * (len(dims_) - 1))
    for l, (d_in, d_out) in enumerate(zip(dims_[:-1], dims_[1:])):
        kw, kb = keys[2 * l], keys[2 * l + 1]
        w = (jax.random.normal(kw, (d_in, d_out), jnp.float32)
             / jnp.sqrt(jnp.float32(d_in)))
        b = 0.1 * jax.random.normal(kb, (1, d_out), jnp.float32)
        params += [w, b]
    return tuple(params)


# Pure-JAX reference (for correctness checks only).
def _reference(state, params):
    h = state.astype(jnp.float32)
    n_layers = len(params) // 2
    for l in range(n_layers):
        w, b = params[2 * l], params[2 * l + 1]
        h = h @ w + b
        if l < n_layers - 1:
            h = jnp.maximum(h, 0.0)
    logits = jnp.logaddexp(h, 0.0)
    m = jnp.max(logits, axis=-1, keepdims=True)
    e = jnp.exp(logits - m)
    s = jnp.sum(e, axis=-1, keepdims=True)
    probs = e / s
    logp = logits - m - jnp.log(s)
    ent = -jnp.sum(probs * logp, axis=-1)
    return probs, logp, ent


if __name__ == "__main__":
    # Small shapes consistent with the module: batch=4, input_dim=16,
    # hidden_dim=[32, 32], hc_action_dim=5.
    B, D = 4, 16
    hidden_dim = [32, 32]
    hc_action_dim = 5
    A = hc_action_dim

    root = jax.random.PRNGKey(0)
    k_param, k_state, k_sample = jax.random.split(root, 3)

    params = init_params(k_param, D, hidden_dim, hc_action_dim)
    packed, dims = pack_params(params, D, hidden_dim, hc_action_dim)
    state = jax.random.normal(k_state, (B, D), jnp.float32)

    # Stochastic path (module default) and deterministic (argmax) path.
    z, z_argmax, info = hc_policy_forward(state, packed, k_sample, dims,
                                          deterministic=False)
    z_d, z_argmax_d, info_d = hc_policy_forward(state, packed, k_sample, dims,
                                                deterministic=True)
    jax.block_until_ready((z, z_argmax, info, z_d, z_argmax_d, info_d))

    # Correctness vs. pure-JAX reference.
    probs_r, logp_r, ent_r = _reference(state, params)

    assert z.shape == (B, A)
    assert bool(jnp.all(jnp.sum(z, axis=-1) == 1))
    assert bool(jnp.array_equal(z, jax.nn.one_hot(z_argmax, A, dtype=jnp.int32)))
    assert jnp.allclose(info["dist_probs"], probs_r, atol=1e-5)
    assert jnp.allclose(info["dist_logp"], logp_r, atol=1e-5)
    assert jnp.allclose(info["entropy"], ent_r, atol=1e-5)
    assert jnp.allclose(
        info["logprobs"],
        jnp.take_along_axis(logp_r, z_argmax[:, None], axis=-1)[:, 0], atol=1e-5)
    assert jnp.allclose(
        info["probs"],
        jnp.take_along_axis(probs_r, z_argmax[:, None], axis=-1)[:, 0], atol=1e-5)
    # Deterministic path must pick the argmax action.
    assert bool(jnp.array_equal(
        z_argmax_d, jnp.argmax(probs_r, axis=-1).astype(jnp.int32)))
    assert jnp.allclose(info_d["probs"], jnp.max(probs_r, axis=-1), atol=1e-5)

    print("KERNEL_OK")
</pallas_src>

<mosaic_0001>
module attributes {stable_mosaic.version = 11 : i64} {
  func.func @kernel(%arg0: i32, %arg1: memref<8x16xf32, #tpu.memory_space<vmem>>, %arg2: memref<8x128xf32, #tpu.memory_space<vmem>>, %arg3: memref<280x128xf32, #tpu.memory_space<vmem>>, %arg4: memref<8x512xf32, #tpu.memory_space<vmem>>) attributes {dimension_semantics = [#tpu.dimension_semantics<parallel>], iteration_bounds = array<i64: 1>, scalar_prefetch = 0 : i64, scratch_operands = 0 : i64, tpu.core_type = #tpu.core_type<tc>, window_params = [{transform_indices = @transform_0, window_bounds = array<i64: 8, 16>}, {transform_indices = @transform_1, window_bounds = array<i64: 8, 128>}, {pipeline_mode = #tpu.pipeline_mode<synchronous>, transform_indices = @transform_2, window_bounds = array<i64: 280, 128>}, {transform_indices = @transform_3, window_bounds = array<i64: 8, 512>}]} {
    %c0 = arith.constant 0 : index
    %c0_0 = arith.constant 0 : index
    %0 = vector.load %arg3[%c0, %c0_0] : memref<280x128xf32, #tpu.memory_space<vmem>>, vector<16x128xf32>
    %c16 = arith.constant 16 : index
    %c0_1 = arith.constant 0 : index
    %1 = vector.load %arg3[%c16, %c0_1] : memref<280x128xf32, #tpu.memory_space<vmem>>, vector<1x128xf32>
    %c0_2 = arith.constant 0 : index
    %c0_3 = arith.constant 0 : index
    %2 = vector.load %arg1[%c0_2, %c0_3] : memref<8x16xf32, #tpu.memory_space<vmem>>, vector<8x16xf32>
    %cst = arith.constant dense<0.000000e+00> : vector<8x128xf32>
    %3 = tpu.matmul %2, %0, %cst {dimension_numbers = #tpu.dot_dimension_numbers<[1], [0], [0], [1], [0, 0, 1, 1], [], []>} : vector<8x16xf32>, vector<16x128xf32>, vector<8x128xf32> -> vector<8x128xf32>
    %4 = vector.broadcast %1 : vector<1x128xf32> to vector<8x128xf32>
    %5 = arith.addf %3, %4 : vector<8x128xf32>
    %cst_4 = arith.constant 0.000000e+00 : f32
    %6 = vector.broadcast %cst_4 : f32 to vector<8x128xf32>
    %7 = arith.maximumf %5, %6 : vector<8x128xf32>
    %c24 = arith.constant 24 : index
    %c0_5 = arith.constant 0 : index
    %8 = vector.load %arg3[%c24, %c0_5] : memref<280x128xf32, #tpu.memory_space<vmem>>, vector<128x128xf32>
    %cst_6 = arith.constant dense<0.000000e+00> : vector<8x128xf32>
    %9 = tpu.matmul %7, %8, %cst_6 {dimension_numbers = #tpu.dot_dimension_numbers<[1], [0], [0], [1], [0, 0, 1, 1], [], []>} : vector<8x128xf32>, vector<128x128xf32>, vector<8x128xf32> -> vector<8x128xf32>
    %cst_7 = arith.constant 0.000000e+00 : f32
    %10 = vector.broadcast %cst_7 : f32 to vector<8x128xf32>
    %11 = arith.maximumf %9, %10 : vector<8x128xf32>
    %c152 = arith.constant 152 : index
    %c0_8 = arith.constant 0 : index
    %12 = vector.load %arg3[%c152, %c0_8] : memref<280x128xf32, #tpu.memory_space<vmem>>, vector<128x128xf32>
    %cst_9 = arith.constant dense<0.000000e+00> : vector<8x128xf32>
    %13 = tpu.matmul %11, %12, %cst_9 {dimension_numbers = #tpu.dot_dimension_numbers<[1], [0], [0], [1], [0, 0, 1, 1], [], []>} : vector<8x128xf32>, vector<128x128xf32>, vector<8x128xf32> -> vector<8x128xf32>
    %14 = tpu.iota {dimensions = array<i32: 1>} : vector<8x128xi32>
    %c5_i32 = arith.constant 5 : i32
    %15 = vector.broadcast %c5_i32 : i32 to vector<8x128xi32>
    %16 = arith.cmpi slt, %14, %15 : vector<8x128xi32>
    %cst_10 = arith.constant 0.000000e+00 : f32
    %17 = vector.broadcast %cst_10 : f32 to vector<8x128xf32>
    %18 = arith.maximumf %13, %17 : vector<8x128xf32>
    %19 = math.absf %13 : vector<8x128xf32>
    %cst_11 = arith.constant 0.000000e+00 : f32
    %20 = vector.broadcast %cst_11 : f32 to vector<8x128xf32>
    %21 = arith.subf %20, %19 : vector<8x128xf32>
    %22 = math.exp %21 : vector<8x128xf32>
    %cst_12 = arith.constant 1.000000e+00 : f32
    %23 = vector.broadcast %cst_12 : f32 to vector<8x128xf32>
    %24 = arith.addf %23, %22 : vector<8x128xf32>
    %25 = math.log %24 : vector<8x128xf32>
    %26 = arith.addf %18, %25 : vector<8x128xf32>
    %cst_13 = arith.constant 0xFF800000 : f32
    %27 = vector.broadcast %cst_13 : f32 to vector<8x128xf32>
    %28 = arith.select %16, %26, %27 : vector<8x128xi1>, vector<8x128xf32>
    %cst_14 = arith.constant dense<0xFF800000> : vector<8xf32>
    %29 = vector.multi_reduction <maximumf>, %28, %cst_14 [1] : vector<8x128xf32> to vector<8xf32>
    %30 = vector.shape_cast %29 : vector<8xf32> to vector<8x1xf32>
    %31 = vector.broadcast %30 : vector<8x1xf32> to vector<8x128xf32>
    %32 = arith.subf %28, %31 : vector<8x128xf32>
    %33 = math.exp %32 : vector<8x128xf32>
    %cst_15 = arith.constant 0.000000e+00 : f32
    %34 = vector.broadcast %cst_15 : f32 to vector<8x128xf32>
    %35 = arith.select %16, %33, %34 : vector<8x128xi1>, vector<8x128xf32>
    %cst_16 = arith.constant dense<0.000000e+00> : vector<8xf32>
    %36 = vector.multi_reduction <add>, %35, %cst_16 [1] : vector<8x128xf32> to vector<8xf32>
    %37 = vector.shape_cast %36 : vector<8xf32> to vector<8x1xf32>
    %cst_17 = arith.constant 1.000000e+00 : f32
    %38 = vector.broadcast %cst_17 : f32 to vector<8x1xf32>
    %39 = arith.divf %38, %37 : vector<8x1xf32>
    %40 = vector.broadcast %39 : vector<8x1xf32> to vector<8x128xf32>
    %41 = arith.mulf %35, %40 : vector<8x128xf32>
    %42 = math.log %37 : vector<8x1xf32>
    %43 = arith.addf %30, %42 : vector<8x1xf32>
    %44 = vector.broadcast %43 : vector<8x1xf32> to vector<8x128xf32>
    %45 = arith.subf %28, %44 : vector<8x128xf32>
    %cst_18 = arith.constant 0.000000e+00 : f32
    %46 = vector.broadcast %cst_18 : f32 to vector<8x128xf32>
    %47 = arith.select %16, %45, %46 : vector<8x128xi1>, vector<8x128xf32>
    %48 = arith.mulf %41, %47 : vector<8x128xf32>
    %cst_19 = arith.constant dense<0.000000e+00> : vector<8xf32>
    %49 = vector.multi_reduction <add>, %48, %cst_19 [1] : vector<8x128xf32> to vector<8xf32>
    %50 = vector.shape_cast %49 : vector<8xf32> to vector<8x1xf32>
    %cst_20 = arith.constant 0.000000e+00 : f32
    %51 = vector.broadcast %cst_20 : f32 to vector<8x1xf32>
    %52 = arith.subf %51, %50 : vector<8x1xf32>
    %c0_21 = arith.constant 0 : index
    %c0_22 = arith.constant 0 : index
    %53 = vector.load %arg2[%c0_21, %c0_22] : memref<8x128xf32, #tpu.memory_space<vmem>>, vector<8x128xf32>
    %54 = arith.divf %41, %53 : vector<8x128xf32>
    %cst_23 = arith.constant -1.000000e+30 : f32
    %55 = vector.broadcast %cst_23 : f32 to vector<8x128xf32>
    %56 = arith.select %16, %54, %55 : vector<8x128xi1>, vector<8x128xf32>
    %cst_24 = arith.constant dense<0xFF800000> : vector<8xf32>
    %57 = vector.multi_reduction <maximumf>, %56, %cst_24 [1] : vector<8x128xf32> to vector<8xf32>
    %58 = vector.shape_cast %57 : vector<8xf32> to vector<8x1xf32>
    %59 = arith.sitofp %14 : vector<8x128xi32> to vector<8x128xf32>
    %60 = vector.broadcast %58 : vector<8x1xf32> to vector<8x128xf32>
    %61 = arith.cmpf oge, %56, %60 : vector<8x128xf32>
    %cst_25 = arith.constant 1.280000e+02 : f32
    %62 = vector.broadcast %cst_25 : f32 to vector<8x128xf32>
    %63 = arith.select %61, %59, %62 : vector<8x128xi1>, vector<8x128xf32>
    %cst_26 = arith.constant dense<0x7F800000> : vector<8xf32>
    %64 = vector.multi_reduction <minimumf>, %63, %cst_26 [1] : vector<8x128xf32> to vector<8xf32>
    %65 = vector.shape_cast %64 : vector<8xf32> to vector<8x1xf32>
    %66 = vector.broadcast %65 : vector<8x1xf32> to vector<8x128xf32>
    %67 = arith.cmpf oeq, %59, %66 : vector<8x128xf32>
    %cst_27 = arith.constant 1.000000e+00 : f32
    %cst_28 = arith.constant 0.000000e+00 : f32
    %68 = vector.broadcast %cst_27 : f32 to vector<8x128xf32>
    %69 = vector.broadcast %cst_28 : f32 to vector<8x128xf32>
    %70 = arith.select %67, %68, %69 : vector<8x128xi1>, vector<8x128xf32>
    %71 = arith.mulf %70, %47 : vector<8x128xf32>
    %cst_29 = arith.constant dense<0.000000e+00> : vector<8xf32>
    %72 = vector.multi_reduction <add>, %71, %cst_29 [1] : vector<8x128xf32> to vector<8xf32>
    %73 = vector.shape_cast %72 : vector<8xf32> to vector<8x1xf32>
    %74 = arith.mulf %70, %41 : vector<8x128xf32>
    %cst_30 = arith.constant dense<0.000000e+00> : vector<8xf32>
    %75 = vector.multi_reduction <add>, %74, %cst_30 [1] : vector<8x128xf32> to vector<8xf32>
    %76 = vector.shape_cast %75 : vector<8xf32> to vector<8x1xf32>
    %c0_31 = arith.constant 0 : index
    %c0_32 = arith.constant 0 : index
    %77 = vector.load %arg4[%c0_31, %c0_32] : memref<8x512xf32, #tpu.memory_space<vmem>>, vector<8x128xf32>
    tpu.vector_store %arg4[%c0_31, %c0_32], %41 {strides = array<i32>} : memref<8x512xf32, #tpu.memory_space<vmem>>, vector<8x128xf32>,
    %c0_33 = arith.constant 0 : index
    %c128 = arith.constant 128 : index
    %78 = vector.load %arg4[%c0_33, %c128] : memref<8x512xf32, #tpu.memory_space<vmem>>, vector<8x128xf32>
    tpu.vector_store %arg4[%c0_33, %c128], %47 {strides = array<i32>} : memref<8x512xf32, #tpu.memory_space<vmem>>, vector<8x128xf32>,
    %c0_34 = arith.constant 0 : index
    %c256 = arith.constant 256 : index
    %79 = vector.load %arg4[%c0_34, %c256] : memref<8x512xf32, #tpu.memory_space<vmem>>, vector<8x128xf32>
    tpu.vector_store %arg4[%c0_34, %c256], %70 {strides = array<i32>} : memref<8x512xf32, #tpu.memory_space<vmem>>, vector<8x128xf32>,
    %80 = tpu.iota {dimensions = array<i32: 1>} : vector<8x128xi32>
    %c0_i32 = arith.constant 0 : i32
    %81 = vector.broadcast %c0_i32 : i32 to vector<8x128xi32>
    %82 = arith.cmpi eq, %80, %81 : vector<8x128xi32>
    %c1_i32 = arith.constant 1 : i32
    %83 = vector.broadcast %c1_i32 : i32 to vector<8x128xi32>
    %84 = arith.cmpi eq, %80, %83 : vector<8x128xi32>
    %c2_i32 = arith.constant 2 : i32
    %85 = vector.broadcast %c2_i32 : i32 to vector<8x128xi32>
    %86 = arith.cmpi eq, %80, %85 : vector<8x128xi32>
    %c3_i32 = arith.constant 3 : i32
    %87 = vector.broadcast %c3_i32 : i32 to vector<8x128xi32>
    %88 = arith.cmpi eq, %80, %87 : vector<8x128xi32>
    %cst_35 = arith.constant 0.000000e+00 : f32
    %89 = vector.shape_cast %76 : vector<8x1xf32> to vector<8x1xf32>
    %90 = vector.broadcast %89 : vector<8x1xf32> to vector<8x128xf32>
    %91 = vector.broadcast %cst_35 : f32 to vector<8x128xf32>
    %92 = arith.select %88, %90, %91 : vector<8x128xi1>, vector<8x128xf32>
    %93 = vector.shape_cast %73 : vector<8x1xf32> to vector<8x1xf32>
    %94 = vector.broadcast %93 : vector<8x1xf32> to vector<8x128xf32>
    %95 = arith.select %86, %94, %92 : vector<8x128xi1>, vector<8x128xf32>
    %96 = vector.shape_cast %65 : vector<8x1xf32> to vector<8x1xf32>
    %97 = vector.broadcast %96 : vector<8x1xf32> to vector<8x128xf32>
    %98 = arith.select %84, %97, %95 : vector<8x128xi1>, vector<8x128xf32>
    %99 = vector.shape_cast %52 : vector<8x1xf32> to vector<8x1xf32>
    %100 = vector.broadcast %99 : vector<8x1xf32> to vector<8x128xf32>
    %101 = arith.select %82, %100, %98 : vector<8x128xi1>, vector<8x128xf32>
    %c0_36 = arith.constant 0 : index
    %c384 = arith.constant 384 : index
    %102 = vector.load %arg4[%c0_36, %c384] : memref<8x512xf32, #tpu.memory_space<vmem>>, vector<8x128xf32>
    tpu.vector_store %arg4[%c0_36, %c384], %101 {strides = array<i32>} : memref<8x512xf32, #tpu.memory_space<vmem>>, vector<8x128xf32>,
    return
  }
  func.func @transform_0(%arg0: i32) -> (i32, i32) {
    %c0_i32 = arith.constant 0 : i32
    %c0_i32_0 = arith.constant 0 : i32
    return %arg0, %c0_i32 : i32, i32
  }
  func.func @transform_1(%arg0: i32) -> (i32, i32) {
    %c0_i32 = arith.constant 0 : i32
    %c0_i32_0 = arith.constant 0 : i32
    return %arg0, %c0_i32 : i32, i32
  }
  func.func @transform_2(%arg0: i32) -> (i32, i32) {
    %c0_i32 = arith.constant 0 : i32
    %c0_i32_0 = arith.constant 0 : i32
    %c0_i32_1 = arith.constant 0 : i32
    return %c0_i32, %c0_i32_0 : i32, i32
  }
  func.func @transform_3(%arg0: i32) -> (i32, i32) {
    %c0_i32 = arith.constant 0 : i32
    %c0_i32_0 = arith.constant 0 : i32
    return %arg0, %c0_i32 : i32, i32
  }
}

</mosaic_0001>

<llo_original>
// kernel: hc_policy_forward.1
$region0: #{hc_policy_forward.1}
  #allocation0 [shape = 'u32[]', space=smem, size = 0x4, offset = 0x4, fixed_abs, tag = 'smem constant byte address 0x4 - core index']
  #allocation1 [shape = 'u32[144,128]{1,0:T(1,128)}', space=vmem, size = 0x12000, scoped, tag = 'internal scratch']
  %s0 = inlined_call_operand.vmem [shape: f32[8,16], index: 0, kind: input, shape index: {}]
  %s1 = inlined_call_operand.vmem [shape: f32[8,128], index: 1, kind: input, shape index: {}]
  %s2 = inlined_call_operand.hbm [shape: f32[280,128], index: 2, kind: input, shape index: {}]
  %s3 = inlined_call_operand.vmem [shape: f32[8,512], index: 3, kind: output, shape index: {}]
  %s4 = sld [smem:[#allocation0]]
  $region26: #{hc_policy_forward.1} parent=0
    _
  %s6 = ssub.s32 1, %s4
  %s7 = scalar_select 0, %s6, %s4
  $region1: #{hc_policy_forward.1} parent=0
    #allocation2 [shape = 'u8[143360]{0}', space=vmem, size = 0x23000, scoped, tag = 'input window, operand 2, single buffered']
    #allocation3 [shape = 's32[1]{0}', space=sflag, size = 0x4, scoped, tag = 'scoped memory for hc_policy_forward.1']
    %8 = vsyncpa [#allocation3], 0
    // Predicated region
    $region2: #{hc_policy_forward.1} parent=1 // pred_check
      _
    $region3: #{hc_policy_forward.1} parent=1 // pred_check_branch
      %10 = sbr.rel (0) target = $region5
    $region4: #{hc_policy_forward.1} parent=1 // pred_region
      _
    $region5: #{hc_policy_forward.1} parent=1 // pred_fallthru
      _
    // Predicated region
    $region6: #{hc_policy_forward.1} parent=1 // pred_check
      _
    $region7: #{hc_policy_forward.1} parent=1 // pred_check_branch
      %12 = sbr.rel (0) target = $region9
    $region8: #{hc_policy_forward.1} parent=1 // pred_region
      _
    $region9: #{hc_policy_forward.1} parent=1 // pred_fallthru
      _
    // Predicated region
    $region10: #{hc_policy_forward.1} parent=1 // pred_check
      _
    $region11: #{hc_policy_forward.1} parent=1 // pred_check_branch
      %14 = sbr.rel (0) target = $region13
    $region12: #{hc_policy_forward.1} parent=1 // pred_region
      %s16 = ssub.s32 4480, 4480
      %17 = vsyncadd [#allocation3], %s16
      %s18 = sshll.u32 [#allocation2], 4
      %s19 = int_to_ptr.vmem [resolvable:$true] %s18
      %24 = dma.hbm_to_vmem [thread:$0]  %s2, 4480, %s19, [#allocation3], 128, 128, 8
    $region13: #{hc_policy_forward.1} parent=1 // pred_fallthru
      _
    // Predicated region
    $region14: #{hc_policy_forward.1} parent=1 // pred_check
      _
    $region15: #{hc_policy_forward.1} parent=1 // pred_check_branch
      %26 = sbr.rel (0) target = $region17
    $region16: #{hc_policy_forward.1} parent=1 // pred_region
      %27 = dma.done [#allocation3], 4480
    $region17: #{hc_policy_forward.1} parent=1 // pred_fallthru
      _
    %v28 = vld [vmem:[#allocation2] sm:$0xff]
    %v29 = vld [vmem:[#allocation2 + $0x8] sm:$0xff]
    %v30 = vld [vmem:[#allocation2 + $0x10] sm:$0x1]
    %v31 = vld [vmem:[%s0] sm:$0xff]
    %v32 = vlaneseq
    %v33 = vshrl.u32 %v32, 7
    %v34 = vsub.s32 0, %v33
    %v35 = vrot.slane %v30, %v34
    %vm36 = vcmask 130048
    %v38 = vsel %vm36, %v31, 0
    %40 = vmatprep.subr.mxu0 0.0
    %41 = vmatpush1.msra.mxu0 %v28
    %42 = vmatprep.subr.mxu0 0.0
    %43 = vmatpush1.msra.mxu0 %v29
    %44 = vmatprep.subr.mxu0 0.0
    %45 = vmatpush1.msra.mxu0 0.0
    %46 = vmatprep.subr.mxu0 0.0
    %47 = vmatpush1.msra.mxu0 0.0
    %48 = vmatprep.subr.mxu0 0.0
    %49 = vmatpush1.msra.mxu0 0.0
    %50 = vmatprep.subr.mxu0 0.0
    %51 = vmatpush1.msra.mxu0 0.0
    %52 = vmatprep.subr.mxu0 0.0
    %53 = vmatpush1.msra.mxu0 0.0
    %54 = vmatprep.subr.mxu0 0.0
    %55 = vmatpush1.msra.mxu0 0.0
    %56 = vmatprep.subr.mxu0 0.0
    %57 = vmatpush1.msra.mxu0 0.0
    %58 = vmatprep.subr.mxu0 0.0
    %59 = vmatpush1.msra.mxu0 0.0
    %60 = vmatprep.subr.mxu0 0.0
    %61 = vmatpush1.msra.mxu0 0.0
    %62 = vmatprep.subr.mxu0 0.0
    %63 = vmatpush1.msra.mxu0 0.0
    %64 = vmatprep.subr.mxu0 0.0
    %65 = vmatpush1.msra.mxu0 0.0
    %66 = vmatprep.subr.mxu0 0.0
    %67 = vmatpush1.msra.mxu0 0.0
    %68 = vmatprep.subr.mxu0 0.0
    %69 = vmatpush1.msra.mxu0 0.0
    %70 = vmatprep.subr.mxu0 0.0
    %71 = vmatpush1.msra.mxu0 0.0
    %72 = vmatprep.subr.mxu0 0.0
    %73 = vmatpush1.msra.mxu0 0.0
    %74 = vmatprep.subr.mxu0 0.0
    %75 = vmatpush1.msra.mxu0 0.0
    %76 = vmatprep.subr.mxu0 0.0
    %77 = vmatpush1.msra.mxu0 0.0
    %78 = vmatprep.subr.mxu0 0.0
    %79 = vmatpush1.msra.mxu0 0.0
    %80 = vmatprep.subr.mxu0 0.0
    %81 = vmatpush1.msra.mxu0 0.0
    %82 = vmatprep.subr.mxu0 0.0
    %83 = vmatpush1.msra.mxu0 0.0
    %84 = vmatprep.subr.mxu0 0.0
    %85 = vmatpush1.msra.mxu0 0.0
    %86 = vmatprep.subr.mxu0 0.0
    %87 = vmatpush1.msra.mxu0 0.0
    %88 = vmatprep.subr.mxu0 0.0
    %89 = vmatpush1.msra.mxu0 0.0
    %90 = vmatprep.subr.mxu0 0.0
    %91 = vmatpush1.msra.mxu0 0.0
    %92 = vmatprep.subr.mxu0 0.0
    %93 = vmatpush1.msra.mxu0 0.0
    %94 = vmatprep.subr.mxu0 0.0
    %95 = vmatpush1.msra.mxu0 0.0
    %96 = vmatprep.subr.mxu0 0.0
    %97 = vmatpush1.msra.mxu0 0.0
    %98 = vmatprep.subr.mxu0 0.0
    %99 = vmatpush1.msra.mxu0 0.0
    %100 = vmatprep.subr.mxu0 0.0
    %101 = vmatpush1.msra.mxu0 0.0
    %102 = vmatprep.subr.mxu0 0.0
    %103 = vmatpush1.msra.mxu0 0.0
    %104 = vmatprep.mubr.f32.mxu0 0.0
    %105 = vmatmul.mubr.f32.gmra.mrb[0].mxu0 %v38
    %v106 = vpop.f32.mrb[0].mxu0
    %v107 = vadd.f32 %v35, %v106
    %v108 = vpop.f32.mrb[0].mxu0
    %109 = vdwg.mxu0
    %v110 = vmax.f32 %v107, 0.0
    %v111 = vld [vmem:[#allocation2 + $0x18] sm:$0xff]
    %v112 = vld [vmem:[#allocation2 + $0x20] sm:$0xff]
    %v113 = vld [vmem:[#allocation2 + $0x28] sm:$0xff]
    %v114 = vld [vmem:[#allocation2 + $0x30] sm:$0xff]
    %v115 = vld [vmem:[#allocation2 + $0x38] sm:$0xff]
    %v116 = vld [vmem:[#allocation2 + $0x40] sm:$0xff]
    %v117 = vld [vmem:[#allocation2 + $0x48] sm:$0xff]
    %v118 = vld [vmem:[#allocation2 + $0x50] sm:$0xff]
    %v119 = vld [vmem:[#allocation2 + $0x58] sm:$0xff]
    %v120 = vld [vmem:[#allocation2 + $0x60] sm:$0xff]
    %v121 = vld [vmem:[#allocation2 + $0x68] sm:$0xff]
    %v122 = vld [vmem:[#allocation2 + $0x70] sm:$0xff]
    %v123 = vld [vmem:[#allocation2 + $0x78] sm:$0xff]
    %v124 = vld [vmem:[#allocation2 + $0x80] sm:$0xff]
    %v125 = vld [vmem:[#allocation2 + $0x88] sm:$0xff]
    %v126 = vld [vmem:[#allocation2 + $0x90] sm:$0xff]
    %127 = vmatprep.subr.mxu0 0.0
    %128 = vmatpush1.msra.mxu0 %v111
    %129 = vmatprep.subr.mxu0 0.0
    %130 = vmatpush1.msra.mxu0 %v112
    %131 = vmatprep.subr.mxu0 0.0
    %132 = vmatpush1.msra.mxu0 %v113
    %133 = vmatprep.subr.mxu0 0.0
    %134 = vmatpush1.msra.mxu0 %v114
    %135 = vmatprep.subr.mxu0 0.0
    %136 = vmatpush1.msra.mxu0 %v115
    %137 = vmatprep.subr.mxu0 0.0
    %138 = vmatpush1.msra.mxu0 %v116
    %139 = vmatprep.subr.mxu0 0.0
    %140 = vmatpush1.msra.mxu0 %v117
    %141 = vmatprep.subr.mxu0 0.0
    %142 = vmatpush1.msra.mxu0 %v118
    %143 = vmatprep.subr.mxu0 0.0
    %144 = vmatpush1.msra.mxu0 %v119
    %145 = vmatprep.subr.mxu0 0.0
    %146 = vmatpush1.msra.mxu0 %v120
    %147 = vmatprep.subr.mxu0 0.0
    %148 = vmatpush1.msra.mxu0 %v121
    %149 = vmatprep.subr.mxu0 0.0
    %150 = vmatpush1.msra.mxu0 %v122
    %151 = vmatprep.subr.mxu0 0.0
    %152 = vmatpush1.msra.mxu0 %v123
    %153 = vmatprep.subr.mxu0 0.0
    %154 = vmatpush1.msra.mxu0 %v124
    %155 = vmatprep.subr.mxu0 0.0
    %156 = vmatpush1.msra.mxu0 %v125
    %157 = vmatprep.subr.mxu0 0.0
    %158 = vmatpush1.msra.mxu0 %v126
    %159 = vmatprep.subr.mxu0 0.0
    %160 = vmatpush1.msra.mxu0 0.0
    %161 = vmatprep.subr.mxu0 0.0
    %162 = vmatpush1.msra.mxu0 0.0
    %163 = vmatprep.subr.mxu0 0.0
    %164 = vmatpush1.msra.mxu0 0.0
    %165 = vmatprep.subr.mxu0 0.0
    %166 = vmatpush1.msra.mxu0 0.0
    %167 = vmatprep.subr.mxu0 0.0
    %168 = vmatpush1.msra.mxu0 0.0
    %169 = vmatprep.subr.mxu0 0.0
    %170 = vmatpush1.msra.mxu0 0.0
    %171 = vmatprep.subr.mxu0 0.0
    %172 = vmatpush1.msra.mxu0 0.0
    %173 = vmatprep.subr.mxu0 0.0
    %174 = vmatpush1.msra.mxu0 0.0
    %175 = vmatprep.subr.mxu0 0.0
    %176 = vmatpush1.msra.mxu0 0.0
    %177 = vmatprep.subr.mxu0 0.0
    %178 = vmatpush1.msra.mxu0 0.0
    %179 = vmatprep.subr.mxu0 0.0
    %180 = vmatpush1.msra.mxu0 0.0
    %181 = vmatprep.subr.mxu0 0.0
    %182 = vmatpush1.msra.mxu0 0.0
    %183 = vmatprep.subr.mxu0 0.0
    %184 = vmatpush1.msra.mxu0 0.0
    %185 = vmatprep.subr.mxu0 0.0
    %186 = vmatpush1.msra.mxu0 0.0
    %187 = vmatprep.subr.mxu0 0.0
    %188 = vmatpush1.msra.mxu0 0.0
    %189 = vmatprep.subr.mxu0 0.0
    %190 = vmatpush1.msra.mxu0 0.0
    %191 = vmatprep.mubr.f32.mxu0 0.0
    %192 = vmatmul.mubr.f32.gmra.mrb[0].mxu0 %v110
    %v193 = vpop.f32.mrb[0].mxu0
    %v194 = vadd.f32 0.0, %v193
    %v195 = vpop.f32.mrb[0].mxu0
    %196 = vdwg.mxu0
    %v197 = vmax.f32 %v194, 0.0
    %v198 = vld [vmem:[#allocation2 + $0x98] sm:$0xff]
    %v199 = vld [vmem:[#allocation2 + $0xa0] sm:$0xff]
    %v200 = vld [vmem:[#allocation2 + $0xa8] sm:$0xff]
    %v201 = vld [vmem:[#allocation2 + $0xb0] sm:$0xff]
    %v202 = vld [vmem:[#allocation2 + $0xb8] sm:$0xff]
    %v203 = vld [vmem:[#allocation2 + $0xc0] sm:$0xff]
    %v204 = vld [vmem:[#allocation2 + $0xc8] sm:$0xff]
    %v205 = vld [vmem:[#allocation2 + $0xd0] sm:$0xff]
    %v206 = vld [vmem:[#allocation2 + $0xd8] sm:$0xff]
    %v207 = vld [vmem:[#allocation2 + $0xe0] sm:$0xff]
    %v208 = vld [vmem:[#allocation2 + $0xe8] sm:$0xff]
    %v209 = vld [vmem:[#allocation2 + $0xf0] sm:$0xff]
    %v210 = vld [vmem:[#allocation2 + $0xf8] sm:$0xff]
    %v211 = vld [vmem:[#allocation2 + $0x100] sm:$0xff]
    %v212 = vld [vmem:[#allocation2 + $0x108] sm:$0xff]
    %v213 = vld [vmem:[#allocation2 + $0x110] sm:$0xff]
    %214 = vmatprep.subr.mxu0 0.0
    %215 = vmatpush1.msra.mxu0 %v198
    %216 = vmatprep.subr.mxu0 0.0
    %217 = vmatpush1.msra.mxu0 %v199
    %218 = vmatprep.subr.mxu0 0.0
    %219 = vmatpush1.msra.mxu0 %v200
    %220 = vmatprep.subr.mxu0 0.0
    %221 = vmatpush1.msra.mxu0 %v201
    %222 = vmatprep.subr.mxu0 0.0
    %223 = vmatpush1.msra.mxu0 %v202
    %224 = vmatprep.subr.mxu0 0.0
    %225 = vmatpush1.msra.mxu0 %v203
    %226 = vmatprep.subr.mxu0 0.0
    %227 = vmatpush1.msra.mxu0 %v204
    %228 = vmatprep.subr.mxu0 0.0
    %229 = vmatpush1.msra.mxu0 %v205
    %230 = vmatprep.subr.mxu0 0.0
    %231 = vmatpush1.msra.mxu0 %v206
    %232 = vmatprep.subr.mxu0 0.0
    %233 = vmatpush1.msra.mxu0 %v207
    %234 = vmatprep.subr.mxu0 0.0
    %235 = vmatpush1.msra.mxu0 %v208
    %236 = vmatprep.subr.mxu0 0.0
    %237 = vmatpush1.msra.mxu0 %v209
    %238 = vmatprep.subr.mxu0 0.0
    %239 = vmatpush1.msra.mxu0 %v210
    %240 = vmatprep.subr.mxu0 0.0
    %241 = vmatpush1.msra.mxu0 %v211
    %242 = vmatprep.subr.mxu0 0.0
    %243 = vmatpush1.msra.mxu0 %v212
    %244 = vmatprep.subr.mxu0 0.0
    %245 = vmatpush1.msra.mxu0 %v213
    %246 = vmatprep.subr.mxu0 0.0
    %247 = vmatpush1.msra.mxu0 0.0
    %248 = vmatprep.subr.mxu0 0.0
    %249 = vmatpush1.msra.mxu0 0.0
    %250 = vmatprep.subr.mxu0 0.0
    %251 = vmatpush1.msra.mxu0 0.0
    %252 = vmatprep.subr.mxu0 0.0
    %253 = vmatpush1.msra.mxu0 0.0
    %254 = vmatprep.subr.mxu0 0.0
    %255 = vmatpush1.msra.mxu0 0.0
    %256 = vmatprep.subr.mxu0 0.0
    %257 = vmatpush1.msra.mxu0 0.0
    %258 = vmatprep.subr.mxu0 0.0
    %259 = vmatpush1.msra.mxu0 0.0
    %260 = vmatprep.subr.mxu0 0.0
    %261 = vmatpush1.msra.mxu0 0.0
    %262 = vmatprep.subr.mxu0 0.0
    %263 = vmatpush1.msra.mxu0 0.0
    %264 = vmatprep.subr.mxu0 0.0
    %265 = vmatpush1.msra.mxu0 0.0
    %266 = vmatprep.subr.mxu0 0.0
    %267 = vmatpush1.msra.mxu0 0.0
    %268 = vmatprep.subr.mxu0 0.0
    %269 = vmatpush1.msra.mxu0 0.0
    %270 = vmatprep.subr.mxu0 0.0
    %271 = vmatpush1.msra.mxu0 0.0
    %272 = vmatprep.subr.mxu0 0.0
    %273 = vmatpush1.msra.mxu0 0.0
    %274 = vmatprep.subr.mxu0 0.0
    %275 = vmatpush1.msra.mxu0 0.0
    %276 = vmatprep.subr.mxu0 0.0
    %277 = vmatpush1.msra.mxu0 0.0
    %278 = vmatprep.mubr.f32.mxu0 0.0
    %279 = vmatmul.mubr.f32.gmra.mrb[0].mxu0 %v197
    %v280 = vpop.f32.mrb[0].mxu0
    %v281 = vadd.f32 0.0, %v280
    %v282 = vpop.f32.mrb[0].mxu0
    %283 = vdwg.mxu0
    %v284 = vlaneseq
    %v285 = vand.u32 %v284, 127
    %vm286 = vcmp.lt.s32.totalorder %v285, 5
    %v287 = vmax.f32 %v281, 0.0
    %v288 = vand.u32 2147483647, %v281
    %v289 = vsub.f32 0.0, %v288
    %v290 = vmul.f32 %v289, 1.442695
    %v291 = vpow.pop %v290
    %v292 = vadd.f32 %v291, 1.0
    %v293 = vlog2.pop %v292
    %v294 = vmul.f32 %v293, 0.6931472
    %v295 = vadd.f32 %v287, %v294
    %v296 = vsel %vm286, %v295, -inf
    %297 = vmax.xlane.f32.xlu0 %v296
    %v298 = vpop.xlane.xlu0 %297
    %v299 = vsub.f32 %v296, %v298
    %v300 = vmul.f32 %v299, 1.442695
    %v301 = vpow.pop %v300
    %v302 = vsel %vm286, %v301, 0.0
    %303 = vadd.xlane.f32.xlu0 %v302
    %v304 = vpop.xlane.xlu0 %303
    %v305 = vrcp.pop %v304
    %v306 = vmul.f32 1.0, %v305
    %v307 = vmul.f32 %v302, %v306
    %v308 = vlog2.pop %v304
    %v309 = vmul.f32 %v308, 0.6931472
    %v310 = vadd.f32 %v298, %v309
    %v311 = vsub.f32 %v296, %v310
    %v312 = vsel %vm286, %v311, 0.0
    %v313 = vmul.f32 %v307, %v312
    %314 = vadd.xlane.f32.xlu0 %v313
    %v315 = vpop.xlane.xlu0 %314
    %v316 = vsub.f32 0.0, %v315
    %v317 = vld [vmem:[%s1] sm:$0xff]
    %v318 = vrcp.pop %v317
    %v319 = vmul.f32 %v307, %v318
    %v320 = vsel %vm286, %v319, -1e+30
    %321 = vmax.xlane.f32.xlu0 %v320
    %v322 = vpop.xlane.xlu0 %321
    %v323 = vcvt.s32.f32 %v285
    %vm324 = vcmp.ge.f32.partialorder %v320, %v322
    %v325 = vsel %vm324, %v323, 128.0
    %326 = vmin.xlane.f32.xlu0 %v325
    %v327 = vpop.xlane.xlu0 %326
    %vm328 = vcmp.eq.f32.partialorder %v323, %v327
    %v329 = vsel %vm328, 1.0, 0.0
    %v330 = vmul.f32 %v329, %v312
    %331 = vadd.xlane.f32.xlu0 %v330
    %v332 = vpop.xlane.xlu0 %331
    %v333 = vmul.f32 %v329, %v307
    %334 = vadd.xlane.f32.xlu0 %v333
    %v335 = vpop.xlane.xlu0 %334
    %336 = vst [vmem:[%s3] sm:$0xff] %v307
    %337 = vst [vmem:[%s3 + $0x8] sm:$0xff] %v312
    %338 = vst [vmem:[%s3 + $0x10] sm:$0xff] %v329
    %vm339 = vcmp.eq.s32.totalorder %v285, 0
    %vm340 = vcmp.eq.s32.totalorder %v285, 1
    %vm341 = vcmp.eq.s32.totalorder %v285, 2
    %vm342 = vcmp.eq.s32.totalorder %v285, 3
    %v343 = vsel %vm342, %v335, 0.0
    %v344 = vsel %vm341, %v332, %v343
    %v345 = vsel %vm340, %v327, %v344
    %v346 = vsel %vm339, %v316, %v345
    %347 = vst [vmem:[%s3 + $0x18] sm:$0xff] %v346
    // Predicated region
    $region18: #{hc_policy_forward.1} parent=1 // pred_check
      _
    $region19: #{hc_policy_forward.1} parent=1 // pred_check_branch
      %349 = sbr.rel (0) target = $region21
    $region20: #{hc_policy_forward.1} parent=1 // pred_region
      _
    $region21: #{hc_policy_forward.1} parent=1 // pred_fallthru
      _
    // Predicated region
    $region22: #{hc_policy_forward.1} parent=1 // pred_check
      _
    $region23: #{hc_policy_forward.1} parent=1 // pred_check_branch
      %351 = sbr.rel (0) target = $region25
    $region24: #{hc_policy_forward.1} parent=1 // pred_region
      _
    $region25: #{hc_policy_forward.1} parent=1 // pred_fallthru
      _
    %352 = vsyncpa [#allocation3], 1

</llo_original>
